<compile_context>
chip_gen: v5e
topology: v5e:2x2
jax: 0.10.0
libtpu: 0.0.40
codegen_flags: <defaults>
</compile_context>

<pallas_src>
import jax
import jax.numpy as jnp
from jax.experimental import pallas as pl
from jax.experimental.pallas import tpu as pltpu

HIDDEN = 4          # Linear(3, 4)
NEG_SLOPE = 0.1     # LeakyReLU(0.1)
SUBLANES = 8        # f32 sublanes per vreg tile
LANES = 128         # lanes per vreg tile


def _cdiv(a, b):
    return -(-a // b)


def _round_up(x, m):
    return _cdiv(x, m) * m


def _chip_profile():
    """Best-effort per-generation tuning.

    Returns (dual_tc, block_elems, vmem_limit_bytes).  Detection failures fall
    back to the conservative (v7x-safe) profile, which is also correct on
    v5e/v6e (only marginally smaller blocks).
    """
    vmem = None
    try:
        vmem = int(pltpu.get_tpu_info().vmem_capacity_bytes)
    except Exception:
        vmem = None
    kind = ""
    try:
        kind = jax.devices()[0].device_kind.lower()
    except Exception:
        pass
    big_vmem = (vmem is not None and vmem >= 100 * 1024 * 1024) or any(
        t in kind for t in ("v4", "v5", "v6"))
    if big_vmem:
        # v5e/v6e: one TensorCore runs the whole grid, 128 MiB VMEM, HBM-bound
        # -> big blocks (4 MiB/plane; 4 planes x 2 buffers = 32 MiB live).
        return False, 1024 * 1024, 64 * 1024 * 1024
    # v7x (or unknown): 64 MiB VMEM per TC, 2 TCs share the "parallel" grid,
    # VALU-bound -> modest blocks (16 MiB live), even grid length preferred.
    return True, 512 * 1024, 32 * 1024 * 1024


def _make_kernel(compute_uz):
    def kernel(w1_ref, b1_ref, w2_ref, b2_ref, u_ref, z_ref, *rest):
        """Fused pointwise 3->4->1 MLP over one (block_b, block_f) tile.

        w1_ref (4,3), b1_ref (4,), w2_ref (4,), b2_ref (1,): SMEM params.
        u_ref / z_ref [/ uz_ref] / o_ref: VMEM tiles.
        """
        if compute_uz:
            (o_ref,) = rest
        else:
            uz_ref, o_ref = rest

        u = u_ref[...].astype(jnp.float32)
        z = z_ref[...].astype(jnp.float32)
        uz = u * z if compute_uz else uz_ref[...].astype(jnp.float32)

        acc = jnp.full(u.shape, b2_ref[0], jnp.float32)
        for j in range(HIDDEN):              # unrolled hidden dim (4)
            h = (u * w1_ref[j, 0]
                 + z * w1_ref[j, 1]
                 + uz * w1_ref[j, 2]
                 + b1_ref[j])
            # LeakyReLU(0.1) == max(h, 0.1*h) since 0.1 < 1; one fewer VALU op
            # than compare+select and still propagates NaN.
            h = jnp.maximum(h, NEG_SLOPE * h)
            acc = acc + w2_ref[j] * h
        o_ref[...] = acc.astype(o_ref.dtype)

    return kernel


def _even_steps(dim, blk, quantum):
    """Try to shrink `blk` so cdiv(dim, blk) becomes even (blk % quantum == 0)."""
    steps = _cdiv(dim, blk)
    if steps % 2 == 0:
        return blk
    target = steps + 1 if steps > 1 else 2
    cand = _round_up(_cdiv(dim, target), quantum)
    if cand >= quantum and _cdiv(dim, cand) % 2 == 0:
        return cand
    return blk


def denoiser_mlp(u, z, uz, w1, b1, w2, b2, *, uz_is_product=False):
    """Denoiser_MLP forward.  u, z, uz: (B, F) float; returns (B, F), u.dtype.

    If uz_is_product=True the uz argument is ignored and recomputed as u*z
    in-kernel (one fewer input plane streamed from HBM).
    """
    B, F = u.shape
    assert z.shape == (B, F) and uz.shape == (B, F)

    # Params go to SMEM as f32 scalars (nn.Linear shapes accepted).
    w1f = jnp.asarray(w1, jnp.float32).reshape(HIDDEN, 3)
    b1f = jnp.asarray(b1, jnp.float32).reshape(HIDDEN)
    w2f = jnp.asarray(w2, jnp.float32).reshape(HIDDEN)
    b2f = jnp.asarray(b2, jnp.float32).reshape(1)

    dual_tc, block_elems, vmem_limit = _chip_profile()

    # ---- 2-D blocks over the natural (B, F) layout -------------------------
    # block_shape dims must be multiples of (8, 128) or equal the full dims;
    # ragged edge blocks get padded reads / masked writes from Pallas, so we
    # never pad or copy anything in HBM.
    max_f = max(LANES, (block_elems // SUBLANES) // LANES * LANES)
    f_padded = F if F < LANES else _round_up(F, LANES)
    block_f = f_padded if f_padded <= max_f else max_f
    grid_f = _cdiv(F, block_f)

    b_budget = max(SUBLANES, (block_elems // block_f) // SUBLANES * SUBLANES)
    block_b = B if B <= SUBLANES else min(_round_up(B, SUBLANES), b_budget)
    grid_b = _cdiv(B, block_b)

    # On dual-TensorCore chips prefer an even number of grid steps so neither
    # core idles; not applied on single-TC chips (would only add a step).
    if dual_tc and (grid_b * grid_f) % 2 == 1:
        if B > SUBLANES:
            block_b = _even_steps(B, block_b, SUBLANES)
            grid_b = _cdiv(B, block_b)
        elif F > LANES:
            block_f = _even_steps(F, block_f, LANES)
            grid_f = _cdiv(F, block_f)

    # ---- pallas_call --------------------------------------------------------
    smem_spec = pl.BlockSpec(memory_space=pltpu.MemorySpace.SMEM)
    vmem_spec = pl.BlockSpec((block_b, block_f), lambda i, j: (i, j))

    data = (u, z) if uz_is_product else (u, z, uz)
    data_specs = [vmem_spec] * len(data)

    out = pl.pallas_call(
        _make_kernel(uz_is_product),
        out_shape=jax.ShapeDtypeStruct((B, F), u.dtype),
        grid_spec=pltpu.PrefetchScalarGridSpec(
            num_scalar_prefetch=0,
            grid=(grid_b, grid_f),
            in_specs=[smem_spec] * 4 + data_specs,
            out_specs=vmem_spec,
        ),
        compiler_params=pltpu.CompilerParams(
            dimension_semantics=("parallel", "parallel"),
            vmem_limit_bytes=vmem_limit),
    )(w1f, b1f, w2f, b2f, *data)
    return out


def _reference(u, z, uz, w1, b1, w2, b2):
    h = jnp.stack([u, z, uz], axis=2)                       # (B, F, 3)
    h = jnp.einsum("bfc,hc->bfh", h, w1) + b1               # (B, F, 4)
    h = jnp.where(h >= 0, h, NEG_SLOPE * h)
    return jnp.einsum("bfh,h->bf", h, w2.reshape(-1)) + b2[0]


if __name__ == "__main__":
    key = jax.random.PRNGKey(0)
    kw1, kb1, kw2, kb2, ku, kz, kuz = jax.random.split(key, 7)

    # nn.Linear-style uniform(-1/sqrt(fan_in), 1/sqrt(fan_in)) init.
    bound1 = 1.0 / (3.0 ** 0.5)
    bound2 = 1.0 / (4.0 ** 0.5)
    w1 = jax.random.uniform(kw1, (HIDDEN, 3), jnp.float32, -bound1, bound1)
    b1 = jax.random.uniform(kb1, (HIDDEN,), jnp.float32, -bound1, bound1)
    w2 = jax.random.uniform(kw2, (1, HIDDEN), jnp.float32, -bound2, bound2)
    b2 = jax.random.uniform(kb2, (1,), jnp.float32, -bound2, bound2)

    run = jax.jit(denoiser_mlp, static_argnames=("uz_is_product",))

    # feat_num = 256, batch = 2 (small shape consistent with the module).
    B, F = 2, 256
    u = jax.random.normal(ku, (B, F), jnp.float32)
    z = jax.random.normal(kz, (B, F), jnp.float32)
    uz = u * z
    out = jax.block_until_ready(run(u, z, uz, w1, b1, w2, b2))
    ref = _reference(u, z, uz, w1, b1, w2, b2)
    assert out.shape == (B, F)
    assert jnp.allclose(out, ref, atol=1e-5, rtol=1e-5), "mismatch vs reference"

    # Ragged shape: exercises partial (masked) edge blocks, no HBM padding.
    B2, F2 = 3, 1000
    u2 = jax.random.normal(ku, (B2, F2), jnp.float32)
    z2 = jax.random.normal(kz, (B2, F2), jnp.float32)
    uz2 = jax.random.normal(kuz, (B2, F2), jnp.float32)
    out2 = jax.block_until_ready(run(u2, z2, uz2, w1, b1, w2, b2))
    ref2 = _reference(u2, z2, uz2, w1, b1, w2, b2)
    assert out2.shape == (B2, F2)
    assert jnp.allclose(out2, ref2, atol=1e-5, rtol=1e-5), "mismatch (ragged)"

    # uz == u*z fast path (one fewer input plane streamed from HBM).
    out3 = jax.block_until_ready(run(u, z, uz, w1, b1, w2, b2, uz_is_product=True))
    assert jnp.allclose(out3, ref, atol=1e-5, rtol=1e-5), "mismatch (uz fast path)"

    print("KERNEL_OK")
</pallas_src>

<mosaic_0001>
module attributes {stable_mosaic.version = 11 : i64} {
  func.func @kernel(%arg0: i32, %arg1: i32, %arg2: memref<4x3xf32, #tpu.memory_space<smem>>, %arg3: memref<4xf32, #tpu.memory_space<smem>>, %arg4: memref<4xf32, #tpu.memory_space<smem>>, %arg5: memref<1xf32, #tpu.memory_space<smem>>, %arg6: memref<2x128xf32, #tpu.memory_space<vmem>>, %arg7: memref<2x128xf32, #tpu.memory_space<vmem>>, %arg8: memref<2x128xf32, #tpu.memory_space<vmem>>, %arg9: memref<2x128xf32, #tpu.memory_space<vmem>>) attributes {dimension_semantics = [#tpu.dimension_semantics<parallel>, #tpu.dimension_semantics<parallel>], iteration_bounds = array<i64: 1, 2>, scalar_prefetch = 0 : i64, scratch_operands = 0 : i64, tpu.core_type = #tpu.core_type<tc>, window_params = [{transform_indices = @transform_0, window_bounds = array<i64: 4, 3>}, {transform_indices = @transform_1, window_bounds = array<i64: 4>}, {transform_indices = @transform_2, window_bounds = array<i64: 4>}, {transform_indices = @transform_3, window_bounds = array<i64: 1>}, {transform_indices = @transform_4, window_bounds = array<i64: 2, 128>}, {transform_indices = @transform_5, window_bounds = array<i64: 2, 128>}, {transform_indices = @transform_6, window_bounds = array<i64: 2, 128>}, {transform_indices = @transform_7, window_bounds = array<i64: 2, 128>}]} {
    %c0 = arith.constant 0 : index
    %c0_0 = arith.constant 0 : index
    %0 = vector.load %arg6[%c0, %c0_0] : memref<2x128xf32, #tpu.memory_space<vmem>>, vector<2x128xf32>
    %c0_1 = arith.constant 0 : index
    %c0_2 = arith.constant 0 : index
    %1 = vector.load %arg7[%c0_1, %c0_2] : memref<2x128xf32, #tpu.memory_space<vmem>>, vector<2x128xf32>
    %c0_3 = arith.constant 0 : index
    %c0_4 = arith.constant 0 : index
    %2 = vector.load %arg8[%c0_3, %c0_4] : memref<2x128xf32, #tpu.memory_space<vmem>>, vector<2x128xf32>
    %c0_5 = arith.constant 0 : index
    %3 = memref.load %arg5[%c0_5] : memref<1xf32, #tpu.memory_space<smem>>
    %4 = vector.broadcast %3 : f32 to vector<2x128xf32>
    %c0_6 = arith.constant 0 : index
    %c0_7 = arith.constant 0 : index
    %5 = memref.load %arg2[%c0_6, %c0_7] : memref<4x3xf32, #tpu.memory_space<smem>>
    %6 = vector.broadcast %5 : f32 to vector<2x128xf32>
    %7 = arith.mulf %0, %6 : vector<2x128xf32>
    %c0_8 = arith.constant 0 : index
    %c1 = arith.constant 1 : index
    %8 = memref.load %arg2[%c0_8, %c1] : memref<4x3xf32, #tpu.memory_space<smem>>
    %9 = vector.broadcast %8 : f32 to vector<2x128xf32>
    %10 = arith.mulf %1, %9 : vector<2x128xf32>
    %11 = arith.addf %7, %10 : vector<2x128xf32>
    %c0_9 = arith.constant 0 : index
    %c2 = arith.constant 2 : index
    %12 = memref.load %arg2[%c0_9, %c2] : memref<4x3xf32, #tpu.memory_space<smem>>
    %13 = vector.broadcast %12 : f32 to vector<2x128xf32>
    %14 = arith.mulf %2, %13 : vector<2x128xf32>
    %15 = arith.addf %11, %14 : vector<2x128xf32>
    %c0_10 = arith.constant 0 : index
    %16 = memref.load %arg3[%c0_10] : memref<4xf32, #tpu.memory_space<smem>>
    %17 = vector.broadcast %16 : f32 to vector<2x128xf32>
    %18 = arith.addf %15, %17 : vector<2x128xf32>
    %cst = arith.constant 1.000000e-01 : f32
    %19 = vector.broadcast %cst : f32 to vector<2x128xf32>
    %20 = arith.mulf %19, %18 : vector<2x128xf32>
    %21 = arith.maximumf %18, %20 : vector<2x128xf32>
    %c0_11 = arith.constant 0 : index
    %22 = memref.load %arg4[%c0_11] : memref<4xf32, #tpu.memory_space<smem>>
    %23 = vector.broadcast %22 : f32 to vector<2x128xf32>
    %24 = arith.mulf %23, %21 : vector<2x128xf32>
    %25 = arith.addf %4, %24 : vector<2x128xf32>
    %c1_12 = arith.constant 1 : index
    %c0_13 = arith.constant 0 : index
    %26 = memref.load %arg2[%c1_12, %c0_13] : memref<4x3xf32, #tpu.memory_space<smem>>
    %27 = vector.broadcast %26 : f32 to vector<2x128xf32>
    %28 = arith.mulf %0, %27 : vector<2x128xf32>
    %c1_14 = arith.constant 1 : index
    %c1_15 = arith.constant 1 : index
    %29 = memref.load %arg2[%c1_14, %c1_15] : memref<4x3xf32, #tpu.memory_space<smem>>
    %30 = vector.broadcast %29 : f32 to vector<2x128xf32>
    %31 = arith.mulf %1, %30 : vector<2x128xf32>
    %32 = arith.addf %28, %31 : vector<2x128xf32>
    %c1_16 = arith.constant 1 : index
    %c2_17 = arith.constant 2 : index
    %33 = memref.load %arg2[%c1_16, %c2_17] : memref<4x3xf32, #tpu.memory_space<smem>>
    %34 = vector.broadcast %33 : f32 to vector<2x128xf32>
    %35 = arith.mulf %2, %34 : vector<2x128xf32>
    %36 = arith.addf %32, %35 : vector<2x128xf32>
    %c1_18 = arith.constant 1 : index
    %37 = memref.load %arg3[%c1_18] : memref<4xf32, #tpu.memory_space<smem>>
    %38 = vector.broadcast %37 : f32 to vector<2x128xf32>
    %39 = arith.addf %36, %38 : vector<2x128xf32>
    %cst_19 = arith.constant 1.000000e-01 : f32
    %40 = vector.broadcast %cst_19 : f32 to vector<2x128xf32>
    %41 = arith.mulf %40, %39 : vector<2x128xf32>
    %42 = arith.maximumf %39, %41 : vector<2x128xf32>
    %c1_20 = arith.constant 1 : index
    %43 = memref.load %arg4[%c1_20] : memref<4xf32, #tpu.memory_space<smem>>
    %44 = vector.broadcast %43 : f32 to vector<2x128xf32>
    %45 = arith.mulf %44, %42 : vector<2x128xf32>
    %46 = arith.addf %25, %45 : vector<2x128xf32>
    %c2_21 = arith.constant 2 : index
    %c0_22 = arith.constant 0 : index
    %47 = memref.load %arg2[%c2_21, %c0_22] : memref<4x3xf32, #tpu.memory_space<smem>>
    %48 = vector.broadcast %47 : f32 to vector<2x128xf32>
    %49 = arith.mulf %0, %48 : vector<2x128xf32>
    %c2_23 = arith.constant 2 : index
    %c1_24 = arith.constant 1 : index
    %50 = memref.load %arg2[%c2_23, %c1_24] : memref<4x3xf32, #tpu.memory_space<smem>>
    %51 = vector.broadcast %50 : f32 to vector<2x128xf32>
    %52 = arith.mulf %1, %51 : vector<2x128xf32>
    %53 = arith.addf %49, %52 : vector<2x128xf32>
    %c2_25 = arith.constant 2 : index
    %c2_26 = arith.constant 2 : index
    %54 = memref.load %arg2[%c2_25, %c2_26] : memref<4x3xf32, #tpu.memory_space<smem>>
    %55 = vector.broadcast %54 : f32 to vector<2x128xf32>
    %56 = arith.mulf %2, %55 : vector<2x128xf32>
    %57 = arith.addf %53, %56 : vector<2x128xf32>
    %c2_27 = arith.constant 2 : index
    %58 = memref.load %arg3[%c2_27] : memref<4xf32, #tpu.memory_space<smem>>
    %59 = vector.broadcast %58 : f32 to vector<2x128xf32>
    %60 = arith.addf %57, %59 : vector<2x128xf32>
    %cst_28 = arith.constant 1.000000e-01 : f32
    %61 = vector.broadcast %cst_28 : f32 to vector<2x128xf32>
    %62 = arith.mulf %61, %60 : vector<2x128xf32>
    %63 = arith.maximumf %60, %62 : vector<2x128xf32>
    %c2_29 = arith.constant 2 : index
    %64 = memref.load %arg4[%c2_29] : memref<4xf32, #tpu.memory_space<smem>>
    %65 = vector.broadcast %64 : f32 to vector<2x128xf32>
    %66 = arith.mulf %65, %63 : vector<2x128xf32>
    %67 = arith.addf %46, %66 : vector<2x128xf32>
    %c3 = arith.constant 3 : index
    %c0_30 = arith.constant 0 : index
    %68 = memref.load %arg2[%c3, %c0_30] : memref<4x3xf32, #tpu.memory_space<smem>>
    %69 = vector.broadcast %68 : f32 to vector<2x128xf32>
    %70 = arith.mulf %0, %69 : vector<2x128xf32>
    %c3_31 = arith.constant 3 : index
    %c1_32 = arith.constant 1 : index
    %71 = memref.load %arg2[%c3_31, %c1_32] : memref<4x3xf32, #tpu.memory_space<smem>>
    %72 = vector.broadcast %71 : f32 to vector<2x128xf32>
    %73 = arith.mulf %1, %72 : vector<2x128xf32>
    %74 = arith.addf %70, %73 : vector<2x128xf32>
    %c3_33 = arith.constant 3 : index
    %c2_34 = arith.constant 2 : index
    %75 = memref.load %arg2[%c3_33, %c2_34] : memref<4x3xf32, #tpu.memory_space<smem>>
    %76 = vector.broadcast %75 : f32 to vector<2x128xf32>
    %77 = arith.mulf %2, %76 : vector<2x128xf32>
    %78 = arith.addf %74, %77 : vector<2x128xf32>
    %c3_35 = arith.constant 3 : index
    %79 = memref.load %arg3[%c3_35] : memref<4xf32, #tpu.memory_space<smem>>
    %80 = vector.broadcast %79 : f32 to vector<2x128xf32>
    %81 = arith.addf %78, %80 : vector<2x128xf32>
    %cst_36 = arith.constant 1.000000e-01 : f32
    %82 = vector.broadcast %cst_36 : f32 to vector<2x128xf32>
    %83 = arith.mulf %82, %81 : vector<2x128xf32>
    %84 = arith.maximumf %81, %83 : vector<2x128xf32>
    %c3_37 = arith.constant 3 : index
    %85 = memref.load %arg4[%c3_37] : memref<4xf32, #tpu.memory_space<smem>>
    %86 = vector.broadcast %85 : f32 to vector<2x128xf32>
    %87 = arith.mulf %86, %84 : vector<2x128xf32>
    %88 = arith.addf %67, %87 : vector<2x128xf32>
    %c0_38 = arith.constant 0 : index
    %c0_39 = arith.constant 0 : index
    %89 = vector.load %arg9[%c0_38, %c0_39] : memref<2x128xf32, #tpu.memory_space<vmem>>, vector<2x128xf32>
    tpu.vector_store %arg9[%c0_38, %c0_39], %88 {strides = array<i32>} : memref<2x128xf32, #tpu.memory_space<vmem>>, vector<2x128xf32>,
    return
  }
  func.func @transform_0(%arg0: i32, %arg1: i32) -> (i32, i32) {
    %c0_i32 = arith.constant 0 : i32
    %c0_i32_0 = arith.constant 0 : i32
    %c0_i32_1 = arith.constant 0 : i32
    return %c0_i32, %c0_i32_0 : i32, i32
  }
  func.func @transform_1(%arg0: i32, %arg1: i32) -> i32 {
    %c0_i32 = arith.constant 0 : i32
    %c0_i32_0 = arith.constant 0 : i32
    return %c0_i32 : i32
  }
  func.func @transform_2(%arg0: i32, %arg1: i32) -> i32 {
    %c0_i32 = arith.constant 0 : i32
    %c0_i32_0 = arith.constant 0 : i32
    return %c0_i32 : i32
  }
  func.func @transform_3(%arg0: i32, %arg1: i32) -> i32 {
    %c0_i32 = arith.constant 0 : i32
    %c0_i32_0 = arith.constant 0 : i32
    return %c0_i32 : i32
  }
  func.func @transform_4(%arg0: i32, %arg1: i32) -> (i32, i32) {
    %c0_i32 = arith.constant 0 : i32
    return %arg0, %arg1 : i32, i32
  }
  func.func @transform_5(%arg0: i32, %arg1: i32) -> (i32, i32) {
    %c0_i32 = arith.constant 0 : i32
    return %arg0, %arg1 : i32, i32
  }
  func.func @transform_6(%arg0: i32, %arg1: i32) -> (i32, i32) {
    %c0_i32 = arith.constant 0 : i32
    return %arg0, %arg1 : i32, i32
  }
  func.func @transform_7(%arg0: i32, %arg1: i32) -> (i32, i32) {
    %c0_i32 = arith.constant 0 : i32
    return %arg0, %arg1 : i32, i32
  }
}

</mosaic_0001>

<llo_original>
// kernel: denoiser_mlp.1
$region0: #{denoiser_mlp.1}
  #allocation0 [shape = 'u32[]', space=smem, size = 0x4, offset = 0x4, fixed_abs, tag = 'smem constant byte address 0x4 - core index']
  #allocation1 [shape = 'u32[72,128]{1,0:T(1,128)}', space=vmem, size = 0x9000, scoped, tag = 'internal scratch']
  #allocation2 [shape = 'f32[1]{0:T(128)S(6)}', space=smem, size = 0x200, scoped, tag = 'scoped memory for denoiser_mlp.1']
  %s0 = inlined_call_operand.vmem [shape: f32[4,3], index: 0, kind: input, shape index: {}]
  %s1 = inlined_call_operand.vmem [shape: f32[4], index: 1, kind: input, shape index: {}]
  %s2 = inlined_call_operand.vmem [shape: f32[4], index: 2, kind: input, shape index: {}]
  %s3 = inlined_call_operand.<no memory space> [shape: f32[1], index: 3, kind: input, shape index: {}]
  %s4 = inlined_call_operand.hbm [shape: f32[2,256], index: 4, kind: input, shape index: {}]
  %s5 = inlined_call_operand.hbm [shape: f32[2,256], index: 5, kind: input, shape index: {}]
  %s6 = inlined_call_operand.hbm [shape: f32[2,256], index: 6, kind: input, shape index: {}]
  %s7 = inlined_call_operand.hbm [shape: f32[2,256], index: 7, kind: output, shape index: {}]
  %s8 = sld [smem:[#allocation0]]
  $region85: #{denoiser_mlp.1} parent=0
    _
  %s10 = ssub.s32 1, %s8
  %s11 = scalar_select 0, %s10, %s8
  %12 = sst [smem:[#allocation2]] %s3
  $region1: #{denoiser_mlp.1} parent=0
    #allocation3 [shape = 'u8[2048]{0}', space=smem, size = 0x800, scoped, tag = 'input window, operand 0, single buffered']
    #allocation4 [shape = 's32[2]{0}', space=sflag, size = 0x8, scoped, tag = 'scoped memory for denoiser_mlp.1']
    #allocation5 [shape = 's32[2]{0}', space=sflag, size = 0x8, scoped, tag = 'scoped memory for denoiser_mlp.1']
    #allocation6 [shape = 's32[2]{0}', space=sflag, size = 0x8, scoped, tag = 'scoped memory for denoiser_mlp.1']
    #allocation7 [shape = 'u8[512]{0}', space=smem, size = 0x200, scoped, tag = 'input window, operand 1, single buffered']
    #allocation8 [shape = 's32[1]{0}', space=sflag, size = 0x4, scoped, tag = 'scoped memory for denoiser_mlp.1']
    #allocation9 [shape = 'u8[512]{0}', space=smem, size = 0x200, scoped, tag = 'input window, operand 2, single buffered']
    #allocation10 [shape = 'u8[2048]{0}', space=vmem, size = 0x800, scoped, tag = 'input window, operand 4']
    #allocation11 [shape = 'u8[2048]{0}', space=vmem, size = 0x800, scoped, tag = 'input window, operand 5']
    #allocation12 [shape = 's32[2]{0}', space=sflag, size = 0x8, scoped, tag = 'scoped memory for denoiser_mlp.1']
    #allocation13 [shape = 'u8[2048]{0}', space=vmem, size = 0x800, scoped, tag = 'input window, operand 6']
    #allocation14 [shape = 'u8[2048]{0}', space=vmem, size = 0x800, scoped, tag = 'output window, operand 0']
    %13 = vsyncpa [#allocation6], 0
    %14 = vsyncpa [#allocation8], 0
    %15 = vsyncpa [#allocation4], 0
    %s16 = scalar_lea.sflag [#allocation4], 1
    %17 = vsyncpa %s16, 0
    %18 = vsyncpa [#allocation12], 0
    %s19 = scalar_lea.sflag [#allocation12], 1
    %20 = vsyncpa %s19, 0
    %21 = vsyncpa [#allocation5], 0
    %s22 = scalar_lea.sflag [#allocation5], 1
    %23 = vsyncpa %s22, 0
    loop: start=0, step=1, limit=4
    $region2: #{denoiser_mlp.1} parent=1 // loop_pre_header
      _
    $region3: #{denoiser_mlp.1} parent=1 // loop_header
      %s25 = sphi 0, %s29
      %p26 = scmp.ge.s32.totalorder %s25, 4
      %s32 = sphi 0, %s44
      %s33 = sphi 0, %s40
      %s34 = sphi 0, %s32
      %s35 = sphi 0, %s33
      %s36 = sphi 0, %s34
      %s37 = sphi 0, %s35
      %s45 = sphi 0, %s45
      %s47 = sphi 0, %s45
      %s48 = sphi 0, %s47
      %s62 = sphi 0, %s48
      %s66 = sphi 0, %s66
      %s68 = sphi 0, %s66
      %s69 = sphi 0, %s68
      %s83 = sphi 0, %s69
      %s87 = sphi 0, %s87
      %s89 = sphi 0, %s87
      %s90 = sphi 0, %s89
      %s104 = sphi 0, %s90
      %s108 = sphi 0, %s108
      %s110 = sphi 0, %s108
      %s111 = sphi 0, %s110
      %s125 = sphi 0, %s111
      %s133 = sphi 0, %s135
      %s136 = sphi 0, %s133
      %s137 = sphi 0, %s136
      %s153 = sphi 0, %s137
      %s161 = sphi 0, %s163
      %s164 = sphi 0, %s161
      %s165 = sphi 0, %s164
      %s181 = sphi 0, %s165
      %s189 = sphi 0, %s191
      %s192 = sphi 0, %s189
      %s193 = sphi 0, %s192
      %s209 = sphi 0, %s193
      %s217 = sphi 0, %s219
      %s220 = sphi 0, %s217
      %s221 = sphi 0, %s220
      %s237 = sphi 0, %s221
    $region4: #{denoiser_mlp.1} parent=1 // loop_header_branch
      %28 = sbr.rel (%p26) target = $region8
    $region5: #{denoiser_mlp.1} parent=1 // loop_body
      %s30 = ssub.s32 %s25, 1
      %s31 = ssub.s32 %s25, 2
      %s38 = sadd.s32 1, %s33
      %p39 = scmp.ge.s32.totalorder %s38, 2
      %s40 = scalar_select %p39, 0, %s38
      %s41 = sadd.s32 1, %s32
      %s42 = scalar_select %p39, %s41, %s32
      %p43 = scmp.ge.s32.totalorder %s42, 1
      %s44 = scalar_select %p43, 0, %s42
      %s46 = sadd.s32 %s45, 1
      %p49 = scmp.eq.s32.totalorder %s25, 1
      %p50 = scmp.ne.s32.totalorder %s45, %s47
      %p51 = scmp.eq.s32.totalorder %s25, 0
      %p52 = por %p50, %p51
      %p53 = scmp.ne.s32.totalorder %s45, %s47
      %p54 = scmp.eq.s32.totalorder %s30, 1
      %p55 = por %p53, %p54
      %p56 = scmp.ne.s32.totalorder %s47, %s48
      %p57 = scmp.eq.s32.totalorder %s30, 0
      %p58 = por %p56, %p57
      %p59 = scmp.ne.s32.totalorder %s47, %s48
      %p60 = scmp.eq.s32.totalorder %s31, 1
      %p61 = por %p59, %p60
      %p63 = scmp.ne.s32.totalorder %s48, %s62
      %p64 = scmp.eq.s32.totalorder %s31, 0
      %p65 = por %p63, %p64
      %s67 = sadd.s32 %s66, 1
      %p70 = scmp.eq.s32.totalorder %s25, 1
      %p71 = scmp.ne.s32.totalorder %s66, %s68
      %p72 = scmp.eq.s32.totalorder %s25, 0
      %p73 = por %p71, %p72
      %p74 = scmp.ne.s32.totalorder %s66, %s68
      %p75 = scmp.eq.s32.totalorder %s30, 1
      %p76 = por %p74, %p75
      %p77 = scmp.ne.s32.totalorder %s68, %s69
      %p78 = scmp.eq.s32.totalorder %s30, 0
      %p79 = por %p77, %p78
      %p80 = scmp.ne.s32.totalorder %s68, %s69
      %p81 = scmp.eq.s32.totalorder %s31, 1
      %p82 = por %p80, %p81
      %p84 = scmp.ne.s32.totalorder %s69, %s83
      %p85 = scmp.eq.s32.totalorder %s31, 0
      %p86 = por %p84, %p85
      %s88 = sadd.s32 %s87, 1
      %p91 = scmp.eq.s32.totalorder %s25, 1
      %p92 = scmp.ne.s32.totalorder %s87, %s89
      %p93 = scmp.eq.s32.totalorder %s25, 0
      %p94 = por %p92, %p93
      %p95 = scmp.ne.s32.totalorder %s87, %s89
      %p96 = scmp.eq.s32.totalorder %s30, 1
      %p97 = por %p95, %p96
      %p98 = scmp.ne.s32.totalorder %s89, %s90
      %p99 = scmp.eq.s32.totalorder %s30, 0
      %p100 = por %p98, %p99
      %p101 = scmp.ne.s32.totalorder %s89, %s90
      %p102 = scmp.eq.s32.totalorder %s31, 1
      %p103 = por %p101, %p102
      %p105 = scmp.ne.s32.totalorder %s90, %s104
      %p106 = scmp.eq.s32.totalorder %s31, 0
      %p107 = por %p105, %p106
      %s109 = sadd.s32 %s108, 1
      %p112 = scmp.eq.s32.totalorder %s25, 1
      %p113 = scmp.ne.s32.totalorder %s108, %s110
      %p114 = scmp.eq.s32.totalorder %s25, 0
      %p115 = por %p113, %p114
      %p116 = scmp.ne.s32.totalorder %s108, %s110
      %p117 = scmp.eq.s32.totalorder %s30, 1
      %p118 = por %p116, %p117
      %p119 = scmp.ne.s32.totalorder %s110, %s111
      %p120 = scmp.eq.s32.totalorder %s30, 0
      %p121 = por %p119, %p120
      %p122 = scmp.ne.s32.totalorder %s110, %s111
      %p123 = scmp.eq.s32.totalorder %s31, 1
      %p124 = por %p122, %p123
      %p126 = scmp.ne.s32.totalorder %s111, %s125
      %p127 = scmp.eq.s32.totalorder %s31, 0
      %p128 = por %p126, %p127
      %s129 = ssub.s32 %s32, %s44
      %s130 = ssub.s32 %s33, %s40
      %s131 = sor.u32 %s129, %s130
      %p132 = scmp.eq.s32.totalorder %s131, 0
      %s134 = sadd.s32 %s133, 1
      %s135 = scalar_select %p132, %s133, %s134
      %p138 = pneg %p132
      %p139 = scmp.eq.s32.totalorder %s25, 1
      %p140 = por %p138, %p139
      %p141 = scmp.ne.s32.totalorder %s133, %s136
      %p142 = scmp.eq.s32.totalorder %s25, 0
      %p143 = por %p141, %p142
      %p144 = scmp.ne.s32.totalorder %s133, %s136
      %p145 = scmp.eq.s32.totalorder %s30, 1
      %p146 = por %p144, %p145
      %p147 = scmp.ne.s32.totalorder %s136, %s137
      %p148 = scmp.eq.s32.totalorder %s30, 0
      %p149 = por %p147, %p148
      %p150 = scmp.ne.s32.totalorder %s136, %s137
      %p151 = scmp.eq.s32.totalorder %s31, 1
      %p152 = por %p150, %p151
      %p154 = scmp.ne.s32.totalorder %s137, %s153
      %p155 = scmp.eq.s32.totalorder %s31, 0
      %p156 = por %p154, %p155
      %s157 = ssub.s32 %s32, %s44
      %s158 = ssub.s32 %s33, %s40
      %s159 = sor.u32 %s157, %s158
      %p160 = scmp.eq.s32.totalorder %s159, 0
      %s162 = sadd.s32 %s161, 1
      %s163 = scalar_select %p160, %s161, %s162
      %p166 = pneg %p160
      %p167 = scmp.eq.s32.totalorder %s25, 1
      %p168 = por %p166, %p167
      %p169 = scmp.ne.s32.totalorder %s161, %s164
      %p170 = scmp.eq.s32.totalorder %s25, 0
      %p171 = por %p169, %p170
      %p172 = scmp.ne.s32.totalorder %s161, %s164
      %p173 = scmp.eq.s32.totalorder %s30, 1
      %p174 = por %p172, %p173
      %p175 = scmp.ne.s32.totalorder %s164, %s165
      %p176 = scmp.eq.s32.totalorder %s30, 0
      %p177 = por %p175, %p176
      %p178 = scmp.ne.s32.totalorder %s164, %s165
      %p179 = scmp.eq.s32.totalorder %s31, 1
      %p180 = por %p178, %p179
      %p182 = scmp.ne.s32.totalorder %s165, %s181
      %p183 = scmp.eq.s32.totalorder %s31, 0
      %p184 = por %p182, %p183
      %s185 = ssub.s32 %s32, %s44
      %s186 = ssub.s32 %s33, %s40
      %s187 = sor.u32 %s185, %s186
      %p188 = scmp.eq.s32.totalorder %s187, 0
      %s190 = sadd.s32 %s189, 1
      %s191 = scalar_select %p188, %s189, %s190
      %p194 = pneg %p188
      %p195 = scmp.eq.s32.totalorder %s25, 1
      %p196 = por %p194, %p195
      %p197 = scmp.ne.s32.totalorder %s189, %s192
      %p198 = scmp.eq.s32.totalorder %s25, 0
      %p199 = por %p197, %p198
      %p200 = scmp.ne.s32.totalorder %s189, %s192
      %p201 = scmp.eq.s32.totalorder %s30, 1
      %p202 = por %p200, %p201
      %p203 = scmp.ne.s32.totalorder %s192, %s193
      %p204 = scmp.eq.s32.totalorder %s30, 0
      %p205 = por %p203, %p204
      %p206 = scmp.ne.s32.totalorder %s192, %s193
      %p207 = scmp.eq.s32.totalorder %s31, 1
      %p208 = por %p206, %p207
      %p210 = scmp.ne.s32.totalorder %s193, %s209
      %p211 = scmp.eq.s32.totalorder %s31, 0
      %p212 = por %p210, %p211
      %s213 = ssub.s32 %s32, %s44
      %s214 = ssub.s32 %s33, %s40
      %s215 = sor.u32 %s213, %s214
      %p216 = scmp.eq.s32.totalorder %s215, 0
      %s218 = sadd.s32 %s217, 1
      %s219 = scalar_select %p216, %s217, %s218
      %p222 = pneg %p216
      %p223 = scmp.eq.s32.totalorder %s25, 1
      %p224 = por %p222, %p223
      %p225 = scmp.ne.s32.totalorder %s217, %s220
      %p226 = scmp.eq.s32.totalorder %s25, 0
      %p227 = por %p225, %p226
      %p228 = scmp.ne.s32.totalorder %s217, %s220
      %p229 = scmp.eq.s32.totalorder %s30, 1
      %p230 = por %p228, %p229
      %p231 = scmp.ne.s32.totalorder %s220, %s221
      %p232 = scmp.eq.s32.totalorder %s30, 0
      %p233 = por %p231, %p232
      %p234 = scmp.ne.s32.totalorder %s220, %s221
      %p235 = scmp.eq.s32.totalorder %s31, 1
      %p236 = por %p234, %p235
      %p238 = scmp.ne.s32.totalorder %s221, %s237
      %p239 = scmp.eq.s32.totalorder %s31, 0
      %p240 = por %p238, %p239
      %p241 = scmp.le.s32.totalorder 1, %s25
      %p242 = scmp.lt.s32.totalorder %s25, 3
      %p243 = pnand %p241, %p242
      %p244 = pneg %p243
      // Predicated region
      $region9: #{denoiser_mlp.1} parent=5 // pred_check
        _
      $region10: #{denoiser_mlp.1} parent=5 // pred_check_branch
        %246 = sbr.rel (%p243) target = $region12
      $region11: #{denoiser_mlp.1} parent=5 // pred_region
        %s247 = ssub.s32 %s25, 1
        // Predicated region
        $region13: #{denoiser_mlp.1} parent=11 // pred_check
          %p248 = pneg %p58
        $region14: #{denoiser_mlp.1} parent=11 // pred_check_branch
          %250 = sbr.rel (%p248) target = $region16
        $region15: #{denoiser_mlp.1} parent=11 // pred_region
          %252 = vsyncadd [#allocation6], 0
          %s254 = sshll.u32 %s0, 4
          %s255 = int_to_ptr.vmem [resolvable:$true] %s254
          %257 = dma.vmem_to_smem %s255, 64, [#allocation3], [#allocation6]
        $region16: #{denoiser_mlp.1} parent=11 // pred_fallthru
          _
        // Predicated region
        $region17: #{denoiser_mlp.1} parent=11 // pred_check
          %p258 = pneg %p79
        $region18: #{denoiser_mlp.1} parent=11 // pred_check_branch
          %260 = sbr.rel (%p258) target = $region20
        $region19: #{denoiser_mlp.1} parent=11 // pred_region
          %262 = vsyncadd [#allocation8], 0
          %s264 = sshll.u32 %s1, 4
          %s265 = int_to_ptr.vmem [resolvable:$true] %s264
          %267 = dma.vmem_to_smem %s265, 16, [#allocation7], [#allocation8]
        $region20: #{denoiser_mlp.1} parent=11 // pred_fallthru
          _
        // Predicated region
        $region21: #{denoiser_mlp.1} parent=11 // pred_check
          %p268 = pneg %p100
        $region22: #{denoiser_mlp.1} parent=11 // pred_check_branch
          %270 = sbr.rel (%p268) target = $region24
        $region23: #{denoiser_mlp.1} parent=11 // pred_region
          %272 = vsyncadd [#allocation8], 0
          %s274 = sshll.u32 %s2, 4
          %s275 = int_to_ptr.vmem [resolvable:$true] %s274
          %277 = dma.vmem_to_smem %s275, 16, [#allocation9], [#allocation8]
        $region24: #{denoiser_mlp.1} parent=11 // pred_fallthru
          _
        // Predicated region
        $region25: #{denoiser_mlp.1} parent=11 // pred_check
          %p278 = pneg %p121
        $region26: #{denoiser_mlp.1} parent=11 // pred_check_branch
          %280 = sbr.rel (%p278) target = $region28
        $region27: #{denoiser_mlp.1} parent=11 // pred_region
          _
        $region28: #{denoiser_mlp.1} parent=11 // pred_fallthru
          _
      $region12: #{denoiser_mlp.1} parent=5 // pred_fallthru
        _
      %p281 = scmp.lt.s32.totalorder %s25, 2
      // Predicated region
      $region29: #{denoiser_mlp.1} parent=5 // pred_check
        %p282 = pneg %p281
      $region30: #{denoiser_mlp.1} parent=5 // pred_check_branch
        %284 = sbr.rel (%p282) target = $region32
      $region31: #{denoiser_mlp.1} parent=5 // pred_region
        // Predicated region
        $region33: #{denoiser_mlp.1} parent=31 // pred_check
          %p285 = pneg %p143
        $region34: #{denoiser_mlp.1} parent=31 // pred_check_branch
          %287 = sbr.rel (%p285) target = $region36
        $region35: #{denoiser_mlp.1} parent=31 // pred_region
          %s288 = sand.u32 %s133, 1
          %s289 = scalar_lea.sflag [#allocation4], %s288
          %s290 = sand.u32 %s133, 1
          %s291 = smul.addr %s290, 2
          %s292 = scalar_lea.vmem [#allocation10], %s291
          %294 = vsyncadd %s289, 0
          %s295 = smul.addr %s32, 2
          %s296 = sadd.s32 %s33, %s295
          %s297 = smul.addr %s296, 2
          %s298 = scalar_lea.hbm %s4, %s297
          %s300 = sshll.u32 %s298, 4
          %s301 = int_to_ptr.hbm [resolvable:$true] %s300
          %s302 = sshll.u32 %s292, 4
          %s303 = int_to_ptr.vmem [resolvable:$true] %s302
          %305 = dma.hbm_to_vmem [thread:$0]  %s301, 32, %s303, %s289
        $region36: #{denoiser_mlp.1} parent=31 // pred_fallthru
          _
        // Predicated region
        $region37: #{denoiser_mlp.1} parent=31 // pred_check
          %p306 = pneg %p171
        $region38: #{denoiser_mlp.1} parent=31 // pred_check_branch
          %308 = sbr.rel (%p306) target = $region40
        $region39: #{denoiser_mlp.1} parent=31 // pred_region
          %s309 = sand.u32 %s25, 1
          %s310 = scalar_lea.sflag [#allocation12], %s309
          %s311 = sand.u32 %s161, 1
          %s312 = smul.addr %s311, 2
          %s313 = scalar_lea.vmem [#allocation11], %s312
          %315 = vsyncadd %s310, 0
          %s316 = smul.addr %s32, 2
          %s317 = sadd.s32 %s33, %s316
          %s318 = smul.addr %s317, 2
          %s319 = scalar_lea.hbm %s5, %s318
          %s321 = sshll.u32 %s319, 4
          %s322 = int_to_ptr.hbm [resolvable:$true] %s321
          %s323 = sshll.u32 %s313, 4
          %s324 = int_to_ptr.vmem [resolvable:$true] %s323
          %326 = dma.hbm_to_vmem [thread:$0]  %s322, 32, %s324, %s310
        $region40: #{denoiser_mlp.1} parent=31 // pred_fallthru
          _
        // Predicated region
        $region41: #{denoiser_mlp.1} parent=31 // pred_check
          %p327 = pneg %p199
        $region42: #{denoiser_mlp.1} parent=31 // pred_check_branch
          %329 = sbr.rel (%p327) target = $region44
        $region43: #{denoiser_mlp.1} parent=31 // pred_region
          %s330 = sand.u32 %s25, 1
          %s331 = scalar_lea.sflag [#allocation12], %s330
          %s332 = sand.u32 %s189, 1
          %s333 = smul.addr %s332, 2
          %s334 = scalar_lea.vmem [#allocation13], %s333
          %336 = vsyncadd %s331, 0
          %s337 = smul.addr %s32, 2
          %s338 = sadd.s32 %s33, %s337
          %s339 = smul.addr %s338, 2
          %s340 = scalar_lea.hbm %s6, %s339
          %s342 = sshll.u32 %s340, 4
          %s343 = int_to_ptr.hbm [resolvable:$true] %s342
          %s344 = sshll.u32 %s334, 4
          %s345 = int_to_ptr.vmem [resolvable:$true] %s344
          %347 = dma.hbm_to_vmem [thread:$0]  %s343, 32, %s345, %s331
        $region44: #{denoiser_mlp.1} parent=31 // pred_fallthru
          _
      $region32: #{denoiser_mlp.1} parent=5 // pred_fallthru
        _
      %p348 = scmp.le.s32.totalorder 1, %s25
      %p349 = scmp.lt.s32.totalorder %s25, 3
      %p350 = pnand %p348, %p349
      %p351 = pneg %p350
      // Predicated region
      $region45: #{denoiser_mlp.1} parent=5 // pred_check
        _
      $region46: #{denoiser_mlp.1} parent=5 // pred_check_branch
        %353 = sbr.rel (%p350) target = $region48
      $region47: #{denoiser_mlp.1} parent=5 // pred_region
        %s354 = ssub.s32 %s25, 1
        // Predicated region
        $region49: #{denoiser_mlp.1} parent=47 // pred_check
          %p355 = pneg %p58
        $region50: #{denoiser_mlp.1} parent=47 // pred_check_branch
          %357 = sbr.rel (%p355) target = $region52
        $region51: #{denoiser_mlp.1} parent=47 // pred_region
          %359 = dma.done [#allocation6], 64
        $region52: #{denoiser_mlp.1} parent=47 // pred_fallthru
          _
        // Predicated region
        $region53: #{denoiser_mlp.1} parent=47 // pred_check
          %p360 = pneg %p79
        $region54: #{denoiser_mlp.1} parent=47 // pred_check_branch
          %362 = sbr.rel (%p360) target = $region56
        $region55: #{denoiser_mlp.1} parent=47 // pred_region
          %364 = dma.done [#allocation8], 16
        $region56: #{denoiser_mlp.1} parent=47 // pred_fallthru
          _
        // Predicated region
        $region57: #{denoiser_mlp.1} parent=47 // pred_check
          %p365 = pneg %p100
        $region58: #{denoiser_mlp.1} parent=47 // pred_check_branch
          %367 = sbr.rel (%p365) target = $region60
        $region59: #{denoiser_mlp.1} parent=47 // pred_region
          %369 = dma.done [#allocation8], 16
        $region60: #{denoiser_mlp.1} parent=47 // pred_fallthru
          _
        %s370 = sand.u32 %s136, 1
        %s371 = scalar_lea.sflag [#allocation4], %s370
        %s372 = sand.u32 %s136, 1
        %s373 = smul.addr %s372, 2
        %s374 = scalar_lea.vmem [#allocation10], %s373
        // Predicated region
        $region61: #{denoiser_mlp.1} parent=47 // pred_check
          %p375 = pneg %p149
        $region62: #{denoiser_mlp.1} parent=47 // pred_check_branch
          %377 = sbr.rel (%p375) target = $region64
        $region63: #{denoiser_mlp.1} parent=47 // pred_region
          %379 = dma.done %s371, 32
        $region64: #{denoiser_mlp.1} parent=47 // pred_fallthru
          _
        %s380 = sand.u32 %s30, 1
        %s381 = scalar_lea.sflag [#allocation12], %s380
        %s382 = sand.u32 %s164, 1
        %s383 = smul.addr %s382, 2
        %s384 = scalar_lea.vmem [#allocation11], %s383
        // Predicated region
        $region65: #{denoiser_mlp.1} parent=47 // pred_check
          %p385 = pneg %p177
        $region66: #{denoiser_mlp.1} parent=47 // pred_check_branch
          %387 = sbr.rel (%p385) target = $region68
        $region67: #{denoiser_mlp.1} parent=47 // pred_region
          %389 = dma.done %s381, 32
        $region68: #{denoiser_mlp.1} parent=47 // pred_fallthru
          _
        %s390 = sand.u32 %s30, 1
        %s391 = scalar_lea.sflag [#allocation12], %s390
        %s392 = sand.u32 %s192, 1
        %s393 = smul.addr %s392, 2
        %s394 = scalar_lea.vmem [#allocation13], %s393
        // Predicated region
        $region69: #{denoiser_mlp.1} parent=47 // pred_check
          %p395 = pneg %p205
        $region70: #{denoiser_mlp.1} parent=47 // pred_check_branch
          %397 = sbr.rel (%p395) target = $region72
        $region71: #{denoiser_mlp.1} parent=47 // pred_region
          %399 = dma.done %s391, 32
        $region72: #{denoiser_mlp.1} parent=47 // pred_fallthru
          _
        %400 = sfence
        %p401 = pneg %p58
        %p402 = pneg %p55
        %p403 = pneg %p79
        %p404 = pneg %p76
        %p405 = pneg %p100
        %p406 = pneg %p97
        %p407 = pneg %p121
        %p408 = pneg %p118
        %s409 = sand.u32 %s136, 1
        %s410 = scalar_lea.sflag [#allocation4], %s409
        %s411 = sand.u32 %s136, 1
        %s412 = smul.addr %s411, 2
        %s413 = scalar_lea.vmem [#allocation10], %s412
        %p414 = pneg %p149
        %p415 = pneg %p146
        %s416 = sand.u32 %s30, 1
        %s417 = scalar_lea.sflag [#allocation12], %s416
        %s418 = sand.u32 %s164, 1
        %s419 = smul.addr %s418, 2
        %s420 = scalar_lea.vmem [#allocation11], %s419
        %p421 = pneg %p177
        %p422 = pneg %p174
        %s423 = sand.u32 %s30, 1
        %s424 = scalar_lea.sflag [#allocation12], %s423
        %s425 = sand.u32 %s192, 1
        %s426 = smul.addr %s425, 2
        %s427 = scalar_lea.vmem [#allocation13], %s426
        %p428 = pneg %p205
        %p429 = pneg %p202
        %p430 = pneg %p233
        %p431 = pneg %p230
        %s432 = sand.u32 %s220, 1
        %s433 = scalar_lea.sflag [#allocation5], %s432
        %s434 = sand.u32 %s220, 1
        %s435 = smul.addr %s434, 2
        %s436 = scalar_lea.vmem [#allocation14], %s435
        %v437 = vld [vmem:[%s374] sm:$0x3]
        %v438 = vld [vmem:[%s384] sm:$0x3]
        %v439 = vld [vmem:[%s394] sm:$0x3]
        %s440 = sld [smem:[#allocation2]]
        %v441 = vstv %s440
        %s442 = sld [smem:[#allocation3]]
        %v443 = vstv %s442
        %v444 = vmul.f32 %v437, %v443
        %s445 = sld [smem:[#allocation3 + $0x1]]
        %v446 = vstv %s445
        %v447 = vmul.f32 %v438, %v446
        %v448 = vadd.f32 %v444, %v447
        %s449 = sld [smem:[#allocation3 + $0x2]]
        %v450 = vstv %s449
        %v451 = vmul.f32 %v439, %v450
        %v452 = vadd.f32 %v448, %v451
        %s453 = sld [smem:[#allocation7]]
        %v454 = vstv %s453
        %v455 = vadd.f32 %v452, %v454
        %v456 = vmul.f32 %v455, 0.1
        %v457 = vmax.f32 %v455, %v456
        %s458 = sld [smem:[#allocation9]]
        %v459 = vstv %s458
        %v460 = vmul.f32 %v459, %v457
        %v461 = vadd.f32 %v441, %v460
        %s462 = sld [smem:[#allocation3 + $0x80]]
        %v463 = vstv %s462
        %v464 = vmul.f32 %v437, %v463
        %s465 = sld [smem:[#allocation3 + $0x81]]
        %v466 = vstv %s465
        %v467 = vmul.f32 %v438, %v466
        %v468 = vadd.f32 %v464, %v467
        %s469 = sld [smem:[#allocation3 + $0x82]]
        %v470 = vstv %s469
        %v471 = vmul.f32 %v439, %v470
        %v472 = vadd.f32 %v468, %v471
        %s473 = sld [smem:[#allocation7 + $0x1]]
        %v474 = vstv %s473
        %v475 = vadd.f32 %v472, %v474
        %v476 = vmul.f32 %v475, 0.1
        %v477 = vmax.f32 %v475, %v476
        %s478 = sld [smem:[#allocation9 + $0x1]]
        %v479 = vstv %s478
        %v480 = vmul.f32 %v479, %v477
        %v481 = vadd.f32 %v461, %v480
        %s482 = sld [smem:[#allocation3 + $0x100]]
        %v483 = vstv %s482
        %v484 = vmul.f32 %v437, %v483
        %s485 = sld [smem:[#allocation3 + $0x101]]
        %v486 = vstv %s485
        %v487 = vmul.f32 %v438, %v486
        %v488 = vadd.f32 %v484, %v487
        %s489 = sld [smem:[#allocation3 + $0x102]]
        %v490 = vstv %s489
        %v491 = vmul.f32 %v439, %v490
        %v492 = vadd.f32 %v488, %v491
        %s493 = sld [smem:[#allocation7 + $0x2]]
        %v494 = vstv %s493
        %v495 = vadd.f32 %v492, %v494
        %v496 = vmul.f32 %v495, 0.1
        %v497 = vmax.f32 %v495, %v496
        %s498 = sld [smem:[#allocation9 + $0x2]]
        %v499 = vstv %s498
        %v500 = vmul.f32 %v499, %v497
        %v501 = vadd.f32 %v481, %v500
        %s502 = sld [smem:[#allocation3 + $0x180]]
        %v503 = vstv %s502
        %v504 = vmul.f32 %v437, %v503
        %s505 = sld [smem:[#allocation3 + $0x181]]
        %v506 = vstv %s505
        %v507 = vmul.f32 %v438, %v506
        %v508 = vadd.f32 %v504, %v507
        %s509 = sld [smem:[#allocation3 + $0x182]]
        %v510 = vstv %s509
        %v511 = vmul.f32 %v439, %v510
        %v512 = vadd.f32 %v508, %v511
        %s513 = sld [smem:[#allocation7 + $0x3]]
        %v514 = vstv %s513
        %v515 = vadd.f32 %v512, %v514
        %v516 = vmul.f32 %v515, 0.1
        %v517 = vmax.f32 %v515, %v516
        %s518 = sld [smem:[#allocation9 + $0x3]]
        %v519 = vstv %s518
        %v520 = vmul.f32 %v519, %v517
        %v521 = vadd.f32 %v501, %v520
        %522 = vst [vmem:[%s436] sm:$0x3] %v521
        %s523 = sand.u32 %s220, 1
        %s524 = scalar_lea.sflag [#allocation5], %s523
        %s525 = sand.u32 %s220, 1
        %s526 = smul.addr %s525, 2
        %s527 = scalar_lea.vmem [#allocation14], %s526
        // Predicated region
        $region73: #{denoiser_mlp.1} parent=47 // pred_check
          %p528 = pneg %p230
        $region74: #{denoiser_mlp.1} parent=47 // pred_check_branch
          %530 = sbr.rel (%p528) target = $region76
        $region75: #{denoiser_mlp.1} parent=47 // pred_region
          %532 = vsyncadd %s524, 0
          %s533 = smul.addr %s34, 2
          %s534 = sadd.s32 %s35, %s533
          %s535 = smul.addr %s534, 2
          %s536 = scalar_lea.hbm %s7, %s535
          %s538 = sshll.u32 %s527, 4
          %s539 = int_to_ptr.vmem [resolvable:$true] %s538
          %s540 = sshll.u32 %s536, 4
          %s541 = int_to_ptr.hbm [resolvable:$true] %s540
          %543 = dma.vmem_to_hbm [thread:$0]  %s539, 32, %s541, %s524
        $region76: #{denoiser_mlp.1} parent=47 // pred_fallthru
          _
      $region48: #{denoiser_mlp.1} parent=5 // pred_fallthru
        _
      %p544 = scmp.le.s32.totalorder 2, %s25
      // Predicated region
      $region77: #{denoiser_mlp.1} parent=5 // pred_check
        %p545 = pneg %p544
      $region78: #{denoiser_mlp.1} parent=5 // pred_check_branch
        %547 = sbr.rel (%p545) target = $region80
      $region79: #{denoiser_mlp.1} parent=5 // pred_region
        %s548 = ssub.s32 %s25, 2
        // Predicated region
        $region81: #{denoiser_mlp.1} parent=79 // pred_check
          %p549 = pneg %p236
        $region82: #{denoiser_mlp.1} parent=79 // pred_check_branch
          %551 = sbr.rel (%p549) target = $region84
        $region83: #{denoiser_mlp.1} parent=79 // pred_region
          %s552 = sand.u32 %s221, 1
          %s553 = scalar_lea.sflag [#allocation5], %s552
          %s554 = sand.u32 %s221, 1
          %s555 = smul.addr %s554, 2
          %s556 = scalar_lea.vmem [#allocation14], %s555
          %558 = dma.done %s553, 32
        $region84: #{denoiser_mlp.1} parent=79 // pred_fallthru
          _
      $region80: #{denoiser_mlp.1} parent=5 // pred_fallthru
        _
    $region6: #{denoiser_mlp.1} parent=1 // loop_footer
      %s29 = sadd.s32 1, %s25
    $region7: #{denoiser_mlp.1} parent=1 // loop_footer_branch
      %24 = sbr.rel target = $region3
    $region8: #{denoiser_mlp.1} parent=1 // loop_exit
      _
    %559 = vsyncpa [#allocation4], 1
    %s560 = scalar_lea.sflag [#allocation4], 1
    %561 = vsyncpa %s560, 1
    %562 = vsyncpa [#allocation12], 1
    %s563 = scalar_lea.sflag [#allocation12], 1
    %564 = vsyncpa %s563, 1
    %565 = vsyncpa [#allocation5], 1
    %s566 = scalar_lea.sflag [#allocation5], 1
    %567 = vsyncpa %s566, 1
    %568 = vsyncpa [#allocation6], 1
    %s569 = scalar_lea.sflag [#allocation6], 1
    %570 = vsyncpa %s569, 1
    %571 = vsyncpa [#allocation8], 1

</llo_original>
